<compile_context>
chip_gen: v5e
topology: v5e:2x2
jax: 0.10.0
libtpu: 0.0.40
codegen_flags: <defaults>
</compile_context>

<pallas_src>
import math
import functools

import jax
import jax.numpy as jnp
from jax import lax
from jax.experimental import pallas as pl
from jax.experimental.pallas import tpu as pltpu


def _round_up(x, m):
    return ((x + m - 1) // m) * m


def _const_spec(shape):
    """BlockSpec for a grid-constant (resident) operand: constant index_map,
    single-buffered (the second pipeline buffer would never be used)."""
    index_map = lambda i: (0,) * len(shape)
    try:
        return pl.BlockSpec(shape, index_map, pipeline_mode=pl.Buffered(1))
    except Exception:  # older jax without pipeline_mode / Buffered
        return pl.BlockSpec(shape, index_map)


def _simple_classifier_kernel(x_ref, w1_ref, p_ref, w2_ref, b2_ref, o_ref, *, eps):
    # x_ref:  (TR, in_dim)    row tile of the flattened input (native dtype)
    # w1_ref: (in_dim, hid)   first Linear weight, pre-transposed
    # p_ref:  (3, hid)        f32 [b1; gamma; beta]
    # w2_ref: (hid, out_pad)  second Linear weight, pre-transposed, lane-padded
    # b2_ref: (1, out_pad)    f32 second Linear bias, lane-padded
    # o_ref:  (TR, out_pad)
    x = x_ref[...]

    # First Linear: x @ W1^T (already laid out (in, hid)); f32 accumulate.
    h = jnp.dot(x, w1_ref[...], preferred_element_type=jnp.float32)
    h = h + p_ref[0:1, :]

    # Exact erf-based gelu (matches the PyTorch reference).
    h = h * 0.5 * (1.0 + lax.erf(h * (1.0 / math.sqrt(2.0))))

    # BertLayerNorm over the hidden dim (biased variance).
    mean = jnp.mean(h, axis=-1, keepdims=True)
    centered = h - mean
    var = jnp.mean(centered * centered, axis=-1, keepdims=True)
    y = centered * lax.rsqrt(var + eps) * p_ref[1:2, :] + p_ref[2:3, :]

    # Second Linear: y @ W2^T (already (hid, out_pad)); f32 accumulate.
    out = jnp.dot(y.astype(w2_ref.dtype), w2_ref[...],
                  preferred_element_type=jnp.float32)
    out = out + b2_ref[...]

    o_ref[...] = out.astype(o_ref.dtype)


def simple_classifier(x, w1, b1, gamma, beta, w2, b2, *, eps=1e-12,
                      tile_rows=512, compute_dtype=None):
    """x: (..., in_dim); w1: (hid, in) PyTorch Linear weight; b1/gamma/beta: (hid,);
       w2: (out, hid) PyTorch Linear weight; b2: (out,).
       compute_dtype: optionally cast x/W1/W2 (e.g. jnp.bfloat16) for full-rate
       MXU on v6e/v7x; default None keeps the module's exact f32 numerics."""
    *lead, in_dim = x.shape
    hid = w1.shape[0]
    out_dim = w2.shape[0]
    rows = int(math.prod(lead)) if lead else 1
    x2d = x.reshape(rows, in_dim)

    if compute_dtype is not None:
        x2d = x2d.astype(compute_dtype)
        w1 = w1.astype(compute_dtype)
        w2 = w2.astype(compute_dtype)

    # One-time HBM-side transposes: both matmuls contract rhs dim 0, so the
    # grid-constant weights are never transposed inside the kernel.
    w1_t = jnp.transpose(w1)   # (in_dim, hid)
    w2_t = jnp.transpose(w2)   # (hid, out_dim)

    # Pad the output lane dim to a multiple of 128 (zero columns in W2/b2) so
    # the output stores are full-lane; slice the padding off once at the end.
    out_pad = _round_up(out_dim, 128)
    if out_pad != out_dim:
        w2_t = jnp.pad(w2_t, ((0, 0), (0, out_pad - out_dim)))
        b2 = jnp.pad(b2, (0, out_pad - out_dim))

    # Fuse the three (hid,) epilogue vectors into one f32 (3, hid) operand.
    params = jnp.stack([b1.astype(jnp.float32),
                        gamma.astype(jnp.float32),
                        beta.astype(jnp.float32)], axis=0)
    b2_2 = b2.reshape(1, out_pad).astype(jnp.float32)

    x_bytes = x2d.dtype.itemsize
    w_bytes = w1_t.dtype.itemsize
    out_bytes = jnp.dtype(x.dtype).itemsize

    def vmem_est(tr_):
        return (2 * tr_ * in_dim * x_bytes            # x tile (double-buffered)
                + 2 * tr_ * out_pad * out_bytes       # out tile (double-buffered)
                + in_dim * hid * w_bytes              # W1 (single-buffered)
                + hid * out_pad * w_bytes             # W2 (single-buffered)
                + 8 * hid * 4 + 8 * out_pad * 4       # params/b2 (sublane-padded)
                + 6 * tr_ * hid * 4)                  # f32 gelu/LN intermediates

    try:
        phys_vmem = int(pltpu.get_tpu_info().vmem_capacity_bytes)
    except Exception:
        phys_vmem = 64 * 1024 * 1024                  # v7x per-TC (smallest)
    budget = (phys_vmem * 3) // 4                     # leave headroom for Mosaic scratch

    # Row tile: as large as tile_rows allows, never larger than the problem,
    # at least 2 grid steps when rows >= 16 (so v7x's 2 TCs both get work),
    # shrunk until the VMEM estimate fits the budget.
    tr = _round_up(min(tile_rows, _round_up(rows, 8)), 8)
    if rows >= 16:
        tr = min(tr, _round_up(pl.cdiv(rows, 2), 8))
    while tr > 8 and vmem_est(tr) > budget:
        tr = max(8, _round_up(tr // 2, 8))
    # TODO(synk): if vmem_est(8) still exceeds the budget (huge in_dim/hid on
    # v7x), fall back to a K-tiled grid (extra "arbitrary" axis over in_dim
    # with a VMEM f32 accumulator and pl.when init/finalize).

    grid = (pl.cdiv(rows, tr),)
    vmem_limit = int(min(budget, max(2 * vmem_est(tr), 16 * 1024 * 1024)))

    cost = pl.CostEstimate(
        flops=2 * rows * (in_dim * hid + hid * out_pad),
        transcendentals=rows * hid,
        bytes_accessed=(rows * in_dim * x_bytes
                        + in_dim * hid * w_bytes + hid * out_pad * w_bytes
                        + 3 * hid * 4 + out_pad * 4
                        + rows * out_pad * out_bytes),
    )

    kernel = functools.partial(_simple_classifier_kernel, eps=eps)

    out = pl.pallas_call(
        kernel,
        out_shape=jax.ShapeDtypeStruct((rows, out_pad), x.dtype),
        grid_spec=pltpu.PrefetchScalarGridSpec(
            num_scalar_prefetch=0,
            grid=grid,
            in_specs=[
                pl.BlockSpec((tr, in_dim), lambda i: (i, 0)),   # x row tile (streamed)
                _const_spec((in_dim, hid)),                     # W1^T (resident)
                _const_spec((3, hid)),                          # [b1; gamma; beta]
                _const_spec((hid, out_pad)),                    # W2^T (resident)
                _const_spec((1, out_pad)),                      # b2
            ],
            out_specs=pl.BlockSpec((tr, out_pad), lambda i: (i, 0)),
        ),
        compiler_params=pltpu.CompilerParams(
            dimension_semantics=("parallel",),   # row axis: megacore-shardable
            vmem_limit_bytes=vmem_limit,
        ),
        cost_estimate=cost,
    )(x2d, w1_t, params, w2_t, b2_2)

    if out_pad != out_dim:
        out = out[:, :out_dim]
    return out.reshape(*lead, out_dim)


if __name__ == "__main__":
    # Small config consistent with SimpleClassifier: batch=2, seq=8,
    # in_dim=32, hid_dim=64, out_dim=16, layer_norm_eps=1e-12.
    B, S = 2, 8
    in_dim, hid_dim, out_dim = 32, 64, 16

    key = jax.random.PRNGKey(0)
    kx, kw1, kw2, kg, kb = jax.random.split(key, 5)

    x = jax.random.normal(kx, (B, S, in_dim), dtype=jnp.float32)
    # PyTorch Linear weights are (out, in); xavier-ish scale, zero biases
    # (matching SimpleClassifier.init_weights), LN weight ~1, LN bias ~0.
    w1 = jax.random.normal(kw1, (hid_dim, in_dim), dtype=jnp.float32) * 0.1
    b1 = jnp.zeros((hid_dim,), dtype=jnp.float32)
    gamma = jnp.ones((hid_dim,), dtype=jnp.float32) \
        + 0.01 * jax.random.normal(kg, (hid_dim,), dtype=jnp.float32)
    beta = 0.01 * jax.random.normal(kb, (hid_dim,), dtype=jnp.float32)
    w2 = jax.random.normal(kw2, (out_dim, hid_dim), dtype=jnp.float32) * 0.1
    b2 = jnp.zeros((out_dim,), dtype=jnp.float32)

    out = simple_classifier(x, w1, b1, gamma, beta, w2, b2, eps=1e-12)
    out = jax.block_until_ready(out)

    # Pure-JAX reference for sanity.
    def ref(x, w1, b1, gamma, beta, w2, b2, eps=1e-12):
        h = jnp.einsum("bsi,hi->bsh", x, w1) + b1
        h = h * 0.5 * (1.0 + lax.erf(h / jnp.sqrt(2.0)))
        mu = jnp.mean(h, axis=-1, keepdims=True)
        var = jnp.mean((h - mu) ** 2, axis=-1, keepdims=True)
        y = (h - mu) / jnp.sqrt(var + eps) * gamma + beta
        return jnp.einsum("bsh,oh->bso", y, w2) + b2

    expected = ref(x, w1, b1, gamma, beta, w2, b2)
    assert out.shape == (B, S, out_dim)
    assert jnp.allclose(out, expected, atol=1e-4, rtol=1e-4), "mismatch vs reference"
    print("KERNEL_OK")
</pallas_src>

<mosaic_0001>
module attributes {stable_mosaic.version = 11 : i64} {
  func.func @_simple_classifier_kernel(%arg0: i32, %arg1: memref<8x32xf32, #tpu.memory_space<vmem>>, %arg2: memref<32x64xf32, #tpu.memory_space<vmem>>, %arg3: memref<3x64xf32, #tpu.memory_space<vmem>>, %arg4: memref<64x128xf32, #tpu.memory_space<vmem>>, %arg5: memref<1x128xf32, #tpu.memory_space<vmem>>, %arg6: memref<8x128xf32, #tpu.memory_space<vmem>>) attributes {dimension_semantics = [#tpu.dimension_semantics<parallel>], iteration_bounds = array<i64: 2>, scalar_prefetch = 0 : i64, scratch_operands = 0 : i64, tpu.core_type = #tpu.core_type<tc>, window_params = [{transform_indices = @transform_0, window_bounds = array<i64: 8, 32>}, {pipeline_mode = #tpu.pipeline_mode<synchronous>, transform_indices = @transform_1, window_bounds = array<i64: 32, 64>}, {pipeline_mode = #tpu.pipeline_mode<synchronous>, transform_indices = @transform_2, window_bounds = array<i64: 3, 64>}, {pipeline_mode = #tpu.pipeline_mode<synchronous>, transform_indices = @transform_3, window_bounds = array<i64: 64, 128>}, {pipeline_mode = #tpu.pipeline_mode<synchronous>, transform_indices = @transform_4, window_bounds = array<i64: 1, 128>}, {transform_indices = @transform_5, window_bounds = array<i64: 8, 128>}]} {
    %c0 = arith.constant 0 : index
    %c0_0 = arith.constant 0 : index
    %0 = vector.load %arg1[%c0, %c0_0] : memref<8x32xf32, #tpu.memory_space<vmem>>, vector<8x32xf32>
    %c0_1 = arith.constant 0 : index
    %c0_2 = arith.constant 0 : index
    %1 = vector.load %arg2[%c0_1, %c0_2] : memref<32x64xf32, #tpu.memory_space<vmem>>, vector<32x64xf32>
    %cst = arith.constant dense<0.000000e+00> : vector<8x64xf32>
    %2 = tpu.matmul %0, %1, %cst {dimension_numbers = #tpu.dot_dimension_numbers<[1], [0], [0], [1], [0, 0, 1, 1], [], []>} : vector<8x32xf32>, vector<32x64xf32>, vector<8x64xf32> -> vector<8x64xf32>
    %c0_3 = arith.constant 0 : index
    %c0_4 = arith.constant 0 : index
    %3 = vector.load %arg3[%c0_3, %c0_4] : memref<3x64xf32, #tpu.memory_space<vmem>>, vector<1x64xf32>
    %4 = vector.broadcast %3 : vector<1x64xf32> to vector<8x64xf32>
    %5 = arith.addf %2, %4 : vector<8x64xf32>
    %cst_5 = arith.constant 5.000000e-01 : f32
    %6 = vector.broadcast %cst_5 : f32 to vector<8x64xf32>
    %7 = arith.mulf %5, %6 : vector<8x64xf32>
    %cst_6 = arith.constant 0.707106769 : f32
    %8 = vector.broadcast %cst_6 : f32 to vector<8x64xf32>
    %9 = arith.mulf %5, %8 : vector<8x64xf32>
    %10 = math.erf %9 : vector<8x64xf32>
    %cst_7 = arith.constant 1.000000e+00 : f32
    %11 = vector.broadcast %cst_7 : f32 to vector<8x64xf32>
    %12 = arith.addf %11, %10 : vector<8x64xf32>
    %13 = arith.mulf %7, %12 : vector<8x64xf32>
    %cst_8 = arith.constant dense<0.000000e+00> : vector<8xf32>
    %14 = vector.multi_reduction <add>, %13, %cst_8 [1] : vector<8x64xf32> to vector<8xf32>
    %15 = vector.shape_cast %14 : vector<8xf32> to vector<8x1xf32>
    %cst_9 = arith.constant 6.400000e+01 : f32
    %16 = vector.broadcast %cst_9 : f32 to vector<8x1xf32>
    %17 = arith.divf %15, %16 : vector<8x1xf32>
    %18 = vector.broadcast %17 : vector<8x1xf32> to vector<8x64xf32>
    %19 = arith.subf %13, %18 : vector<8x64xf32>
    %20 = arith.mulf %19, %19 : vector<8x64xf32>
    %cst_10 = arith.constant dense<0.000000e+00> : vector<8xf32>
    %21 = vector.multi_reduction <add>, %20, %cst_10 [1] : vector<8x64xf32> to vector<8xf32>
    %22 = vector.shape_cast %21 : vector<8xf32> to vector<8x1xf32>
    %cst_11 = arith.constant 6.400000e+01 : f32
    %23 = vector.broadcast %cst_11 : f32 to vector<8x1xf32>
    %24 = arith.divf %22, %23 : vector<8x1xf32>
    %cst_12 = arith.constant 9.99999996E-13 : f32
    %25 = vector.broadcast %cst_12 : f32 to vector<8x1xf32>
    %26 = arith.addf %24, %25 : vector<8x1xf32>
    %27 = math.rsqrt %26 : vector<8x1xf32>
    %28 = vector.broadcast %27 : vector<8x1xf32> to vector<8x64xf32>
    %29 = arith.mulf %19, %28 : vector<8x64xf32>
    %c1 = arith.constant 1 : index
    %c0_13 = arith.constant 0 : index
    %30 = vector.load %arg3[%c1, %c0_13] : memref<3x64xf32, #tpu.memory_space<vmem>>, vector<1x64xf32>
    %31 = vector.broadcast %30 : vector<1x64xf32> to vector<8x64xf32>
    %32 = arith.mulf %29, %31 : vector<8x64xf32>
    %c2 = arith.constant 2 : index
    %c0_14 = arith.constant 0 : index
    %33 = vector.load %arg3[%c2, %c0_14] : memref<3x64xf32, #tpu.memory_space<vmem>>, vector<1x64xf32>
    %34 = vector.broadcast %33 : vector<1x64xf32> to vector<8x64xf32>
    %35 = arith.addf %32, %34 : vector<8x64xf32>
    %c0_15 = arith.constant 0 : index
    %c0_16 = arith.constant 0 : index
    %36 = vector.load %arg4[%c0_15, %c0_16] : memref<64x128xf32, #tpu.memory_space<vmem>>, vector<64x128xf32>
    %cst_17 = arith.constant dense<0.000000e+00> : vector<8x128xf32>
    %37 = tpu.matmul %35, %36, %cst_17 {dimension_numbers = #tpu.dot_dimension_numbers<[1], [0], [0], [1], [0, 0, 1, 1], [], []>} : vector<8x64xf32>, vector<64x128xf32>, vector<8x128xf32> -> vector<8x128xf32>
    %c0_18 = arith.constant 0 : index
    %c0_19 = arith.constant 0 : index
    %38 = vector.load %arg5[%c0_18, %c0_19] : memref<1x128xf32, #tpu.memory_space<vmem>>, vector<1x128xf32>
    %39 = vector.broadcast %38 : vector<1x128xf32> to vector<8x128xf32>
    %40 = arith.addf %37, %39 : vector<8x128xf32>
    %c0_20 = arith.constant 0 : index
    %c0_21 = arith.constant 0 : index
    %41 = vector.load %arg6[%c0_20, %c0_21] : memref<8x128xf32, #tpu.memory_space<vmem>>, vector<8x128xf32>
    tpu.vector_store %arg6[%c0_20, %c0_21], %40 {strides = array<i32>} : memref<8x128xf32, #tpu.memory_space<vmem>>, vector<8x128xf32>,
    return
  }
  func.func @transform_0(%arg0: i32) -> (i32, i32) {
    %c0_i32 = arith.constant 0 : i32
    %c0_i32_0 = arith.constant 0 : i32
    return %arg0, %c0_i32 : i32, i32
  }
  func.func @transform_1(%arg0: i32) -> (i32, i32) {
    %c0_i32 = arith.constant 0 : i32
    %c0_i32_0 = arith.constant 0 : i32
    %c0_i32_1 = arith.constant 0 : i32
    return %c0_i32, %c0_i32_0 : i32, i32
  }
  func.func @transform_2(%arg0: i32) -> (i32, i32) {
    %c0_i32 = arith.constant 0 : i32
    %c0_i32_0 = arith.constant 0 : i32
    %c0_i32_1 = arith.constant 0 : i32
    return %c0_i32, %c0_i32_0 : i32, i32
  }
  func.func @transform_3(%arg0: i32) -> (i32, i32) {
    %c0_i32 = arith.constant 0 : i32
    %c0_i32_0 = arith.constant 0 : i32
    %c0_i32_1 = arith.constant 0 : i32
    return %c0_i32, %c0_i32_0 : i32, i32
  }
  func.func @transform_4(%arg0: i32) -> (i32, i32) {
    %c0_i32 = arith.constant 0 : i32
    %c0_i32_0 = arith.constant 0 : i32
    %c0_i32_1 = arith.constant 0 : i32
    return %c0_i32, %c0_i32_0 : i32, i32
  }
  func.func @transform_5(%arg0: i32) -> (i32, i32) {
    %c0_i32 = arith.constant 0 : i32
    %c0_i32_0 = arith.constant 0 : i32
    return %arg0, %c0_i32 : i32, i32
  }
}

</mosaic_0001>

<llo_original>
// kernel: tpu_custom_call.1
$region0: #{tpu_custom_call.1}
  #allocation0 [shape = 'u32[]', space=smem, size = 0x4, offset = 0x4, fixed_abs, tag = 'smem constant byte address 0x4 - core index']
  #allocation1 [shape = 'u32[72,128]{1,0:T(1,128)}', space=vmem, size = 0x9000, scoped, tag = 'internal scratch']
  %s0 = inlined_call_operand.hbm [shape: f32[16,32], index: 0, kind: input, shape index: {}]
  %s1 = inlined_call_operand.hbm [shape: f32[32,64], index: 1, kind: input, shape index: {}]
  %s2 = inlined_call_operand.hbm [shape: f32[3,64], index: 2, kind: input, shape index: {}]
  %s3 = inlined_call_operand.hbm [shape: f32[64,128], index: 3, kind: input, shape index: {}]
  %s4 = inlined_call_operand.vmem [shape: f32[1,128], index: 4, kind: input, shape index: {}]
  %s5 = inlined_call_operand.hbm [shape: f32[16,128], index: 5, kind: output, shape index: {}]
  %s6 = sld [smem:[#allocation0]]
  $region69: #{tpu_custom_call.1} parent=0
    _
  %s8 = ssub.s32 1, %s6
  %s9 = scalar_select 0, %s8, %s6
  $region1: #{tpu_custom_call.1} parent=0
    #allocation2 [shape = 'u8[8192]{0}', space=vmem, size = 0x2000, scoped, tag = 'input window, operand 0']
    #allocation3 [shape = 's32[2]{0}', space=sflag, size = 0x8, scoped, tag = 'scoped memory for tpu_custom_call.1']
    #allocation4 [shape = 's32[2]{0}', space=sflag, size = 0x8, scoped, tag = 'scoped memory for tpu_custom_call.1']
    #allocation5 [shape = 'u8[16384]{0}', space=vmem, size = 0x4000, scoped, tag = 'input window, operand 1, single buffered']
    #allocation6 [shape = 's32[1]{0}', space=sflag, size = 0x4, scoped, tag = 'scoped memory for tpu_custom_call.1']
    #allocation7 [shape = 'u8[2048]{0}', space=vmem, size = 0x800, scoped, tag = 'input window, operand 2, single buffered']
    #allocation8 [shape = 'u8[32768]{0}', space=vmem, size = 0x8000, scoped, tag = 'input window, operand 3, single buffered']
    #allocation9 [shape = 's32[1]{0}', space=sflag, size = 0x4, scoped, tag = 'scoped memory for tpu_custom_call.1']
    #allocation10 [shape = 'u8[8192]{0}', space=vmem, size = 0x2000, scoped, tag = 'output window, operand 0']
    %10 = vsyncpa [#allocation3], 0
    %s11 = scalar_lea.sflag [#allocation3], 1
    %12 = vsyncpa %s11, 0
    %13 = vsyncpa [#allocation6], 0
    %14 = vsyncpa [#allocation9], 0
    %15 = vsyncpa [#allocation4], 0
    %s16 = scalar_lea.sflag [#allocation4], 1
    %17 = vsyncpa %s16, 0
    loop: start=0, step=1, limit=4
    $region2: #{tpu_custom_call.1} parent=1 // loop_pre_header
      _
    $region3: #{tpu_custom_call.1} parent=1 // loop_header
      %s19 = sphi 0, %s23
      %p20 = scmp.ge.s32.totalorder %s19, 4
      %s29 = sphi 0, %s31
      %s32 = sphi 0, %s29
      %s33 = sphi 0, %s32
      %s49 = sphi 0, %s33
      %s53 = sphi 0, %s53
      %s55 = sphi 0, %s53
      %s56 = sphi 0, %s55
      %s70 = sphi 0, %s56
      %s74 = sphi 0, %s74
      %s76 = sphi 0, %s74
      %s77 = sphi 0, %s76
      %s91 = sphi 0, %s77
      %s95 = sphi 0, %s95
      %s97 = sphi 0, %s95
      %s98 = sphi 0, %s97
      %s112 = sphi 0, %s98
      %s116 = sphi 0, %s116
      %s118 = sphi 0, %s116
      %s119 = sphi 0, %s118
      %s133 = sphi 0, %s119
      %s139 = sphi 0, %s141
      %s142 = sphi 0, %s139
      %s143 = sphi 0, %s142
      %s159 = sphi 0, %s143
    $region4: #{tpu_custom_call.1} parent=1 // loop_header_branch
      %22 = sbr.rel (%p20) target = $region8
    $region5: #{tpu_custom_call.1} parent=1 // loop_body
      %s24 = ssub.s32 %s19, 1
      %s25 = ssub.s32 %s19, 2
      %s26 = sadd.s32 %s19, 1
      %s27 = ssub.s32 %s19, %s26
      %p28 = scmp.eq.s32.totalorder %s27, 0
      %s30 = sadd.s32 %s29, 1
      %s31 = scalar_select %p28, %s29, %s30
      %p34 = pneg %p28
      %p35 = scmp.eq.s32.totalorder %s19, 1
      %p36 = por %p34, %p35
      %p37 = scmp.ne.s32.totalorder %s29, %s32
      %p38 = scmp.eq.s32.totalorder %s19, 0
      %p39 = por %p37, %p38
      %p40 = scmp.ne.s32.totalorder %s29, %s32
      %p41 = scmp.eq.s32.totalorder %s24, 1
      %p42 = por %p40, %p41
      %p43 = scmp.ne.s32.totalorder %s32, %s33
      %p44 = scmp.eq.s32.totalorder %s24, 0
      %p45 = por %p43, %p44
      %p46 = scmp.ne.s32.totalorder %s32, %s33
      %p47 = scmp.eq.s32.totalorder %s25, 1
      %p48 = por %p46, %p47
      %p50 = scmp.ne.s32.totalorder %s33, %s49
      %p51 = scmp.eq.s32.totalorder %s25, 0
      %p52 = por %p50, %p51
      %s54 = sadd.s32 %s53, 1
      %p57 = scmp.eq.s32.totalorder %s19, 1
      %p58 = scmp.ne.s32.totalorder %s53, %s55
      %p59 = scmp.eq.s32.totalorder %s19, 0
      %p60 = por %p58, %p59
      %p61 = scmp.ne.s32.totalorder %s53, %s55
      %p62 = scmp.eq.s32.totalorder %s24, 1
      %p63 = por %p61, %p62
      %p64 = scmp.ne.s32.totalorder %s55, %s56
      %p65 = scmp.eq.s32.totalorder %s24, 0
      %p66 = por %p64, %p65
      %p67 = scmp.ne.s32.totalorder %s55, %s56
      %p68 = scmp.eq.s32.totalorder %s25, 1
      %p69 = por %p67, %p68
      %p71 = scmp.ne.s32.totalorder %s56, %s70
      %p72 = scmp.eq.s32.totalorder %s25, 0
      %p73 = por %p71, %p72
      %s75 = sadd.s32 %s74, 1
      %p78 = scmp.eq.s32.totalorder %s19, 1
      %p79 = scmp.ne.s32.totalorder %s74, %s76
      %p80 = scmp.eq.s32.totalorder %s19, 0
      %p81 = por %p79, %p80
      %p82 = scmp.ne.s32.totalorder %s74, %s76
      %p83 = scmp.eq.s32.totalorder %s24, 1
      %p84 = por %p82, %p83
      %p85 = scmp.ne.s32.totalorder %s76, %s77
      %p86 = scmp.eq.s32.totalorder %s24, 0
      %p87 = por %p85, %p86
      %p88 = scmp.ne.s32.totalorder %s76, %s77
      %p89 = scmp.eq.s32.totalorder %s25, 1
      %p90 = por %p88, %p89
      %p92 = scmp.ne.s32.totalorder %s77, %s91
      %p93 = scmp.eq.s32.totalorder %s25, 0
      %p94 = por %p92, %p93
      %s96 = sadd.s32 %s95, 1
      %p99 = scmp.eq.s32.totalorder %s19, 1
      %p100 = scmp.ne.s32.totalorder %s95, %s97
      %p101 = scmp.eq.s32.totalorder %s19, 0
      %p102 = por %p100, %p101
      %p103 = scmp.ne.s32.totalorder %s95, %s97
      %p104 = scmp.eq.s32.totalorder %s24, 1
      %p105 = por %p103, %p104
      %p106 = scmp.ne.s32.totalorder %s97, %s98
      %p107 = scmp.eq.s32.totalorder %s24, 0
      %p108 = por %p106, %p107
      %p109 = scmp.ne.s32.totalorder %s97, %s98
      %p110 = scmp.eq.s32.totalorder %s25, 1
      %p111 = por %p109, %p110
      %p113 = scmp.ne.s32.totalorder %s98, %s112
      %p114 = scmp.eq.s32.totalorder %s25, 0
      %p115 = por %p113, %p114
      %s117 = sadd.s32 %s116, 1
      %p120 = scmp.eq.s32.totalorder %s19, 1
      %p121 = scmp.ne.s32.totalorder %s116, %s118
      %p122 = scmp.eq.s32.totalorder %s19, 0
      %p123 = por %p121, %p122
      %p124 = scmp.ne.s32.totalorder %s116, %s118
      %p125 = scmp.eq.s32.totalorder %s24, 1
      %p126 = por %p124, %p125
      %p127 = scmp.ne.s32.totalorder %s118, %s119
      %p128 = scmp.eq.s32.totalorder %s24, 0
      %p129 = por %p127, %p128
      %p130 = scmp.ne.s32.totalorder %s118, %s119
      %p131 = scmp.eq.s32.totalorder %s25, 1
      %p132 = por %p130, %p131
      %p134 = scmp.ne.s32.totalorder %s119, %s133
      %p135 = scmp.eq.s32.totalorder %s25, 0
      %p136 = por %p134, %p135
      %s137 = ssub.s32 %s19, %s26
      %p138 = scmp.eq.s32.totalorder %s137, 0
      %s140 = sadd.s32 %s139, 1
      %s141 = scalar_select %p138, %s139, %s140
      %p144 = pneg %p138
      %p145 = scmp.eq.s32.totalorder %s19, 1
      %p146 = por %p144, %p145
      %p147 = scmp.ne.s32.totalorder %s139, %s142
      %p148 = scmp.eq.s32.totalorder %s19, 0
      %p149 = por %p147, %p148
      %p150 = scmp.ne.s32.totalorder %s139, %s142
      %p151 = scmp.eq.s32.totalorder %s24, 1
      %p152 = por %p150, %p151
      %p153 = scmp.ne.s32.totalorder %s142, %s143
      %p154 = scmp.eq.s32.totalorder %s24, 0
      %p155 = por %p153, %p154
      %p156 = scmp.ne.s32.totalorder %s142, %s143
      %p157 = scmp.eq.s32.totalorder %s25, 1
      %p158 = por %p156, %p157
      %p160 = scmp.ne.s32.totalorder %s143, %s159
      %p161 = scmp.eq.s32.totalorder %s25, 0
      %p162 = por %p160, %p161
      %p163 = scmp.le.s32.totalorder 1, %s19
      %p164 = scmp.lt.s32.totalorder %s19, 3
      %p165 = pnand %p163, %p164
      %p166 = pneg %p165
      // Predicated region
      $region9: #{tpu_custom_call.1} parent=5 // pred_check
        _
      $region10: #{tpu_custom_call.1} parent=5 // pred_check_branch
        %168 = sbr.rel (%p165) target = $region12
      $region11: #{tpu_custom_call.1} parent=5 // pred_region
        %s169 = ssub.s32 %s19, 1
        // Predicated region
        $region13: #{tpu_custom_call.1} parent=11 // pred_check
          %p170 = pneg %p66
        $region14: #{tpu_custom_call.1} parent=11 // pred_check_branch
          %172 = sbr.rel (%p170) target = $region16
        $region15: #{tpu_custom_call.1} parent=11 // pred_region
          %174 = vsyncadd [#allocation6], 0
          %s175 = sshll.u32 %s1, 4
          %s176 = int_to_ptr.hbm [resolvable:$true] %s175
          %s177 = sshll.u32 [#allocation5], 4
          %s178 = int_to_ptr.vmem [resolvable:$true] %s177
          %183 = dma.hbm_to_vmem [thread:$0]  %s176, 512, %s178, [#allocation6], 128, 128, 8
        $region16: #{tpu_custom_call.1} parent=11 // pred_fallthru
          _
        // Predicated region
        $region17: #{tpu_custom_call.1} parent=11 // pred_check
          %p184 = pneg %p87
        $region18: #{tpu_custom_call.1} parent=11 // pred_check_branch
          %186 = sbr.rel (%p184) target = $region20
        $region19: #{tpu_custom_call.1} parent=11 // pred_region
          %188 = vsyncadd [#allocation6], 0
          %s190 = sshll.u32 %s2, 4
          %s191 = int_to_ptr.hbm [resolvable:$true] %s190
          %s192 = sshll.u32 [#allocation7], 4
          %s193 = int_to_ptr.vmem [resolvable:$true] %s192
          %195 = dma.hbm_to_vmem [thread:$0]  %s191, 64, %s193, [#allocation6]
        $region20: #{tpu_custom_call.1} parent=11 // pred_fallthru
          _
        // Predicated region
        $region21: #{tpu_custom_call.1} parent=11 // pred_check
          %p196 = pneg %p108
        $region22: #{tpu_custom_call.1} parent=11 // pred_check_branch
          %198 = sbr.rel (%p196) target = $region24
        $region23: #{tpu_custom_call.1} parent=11 // pred_region
          %200 = vsyncadd [#allocation9], 0
          %s201 = sshll.u32 %s3, 4
          %s202 = int_to_ptr.hbm [resolvable:$true] %s201
          %s203 = sshll.u32 [#allocation8], 4
          %s204 = int_to_ptr.vmem [resolvable:$true] %s203
          %209 = dma.hbm_to_vmem [thread:$0]  %s202, 1024, %s204, [#allocation9], 128, 128, 8
        $region24: #{tpu_custom_call.1} parent=11 // pred_fallthru
          _
        // Predicated region
        $region25: #{tpu_custom_call.1} parent=11 // pred_check
          %p210 = pneg %p129
        $region26: #{tpu_custom_call.1} parent=11 // pred_check_branch
          %212 = sbr.rel (%p210) target = $region28
        $region27: #{tpu_custom_call.1} parent=11 // pred_region
          _
        $region28: #{tpu_custom_call.1} parent=11 // pred_fallthru
          _
      $region12: #{tpu_custom_call.1} parent=5 // pred_fallthru
        _
      %p213 = scmp.lt.s32.totalorder %s19, 2
      // Predicated region
      $region29: #{tpu_custom_call.1} parent=5 // pred_check
        %p214 = pneg %p213
      $region30: #{tpu_custom_call.1} parent=5 // pred_check_branch
        %216 = sbr.rel (%p214) target = $region32
      $region31: #{tpu_custom_call.1} parent=5 // pred_region
        // Predicated region
        $region33: #{tpu_custom_call.1} parent=31 // pred_check
          %p217 = pneg %p39
        $region34: #{tpu_custom_call.1} parent=31 // pred_check_branch
          %219 = sbr.rel (%p217) target = $region36
        $region35: #{tpu_custom_call.1} parent=31 // pred_region
          %s220 = sand.u32 %s29, 1
          %s221 = scalar_lea.sflag [#allocation3], %s220
          %s222 = sand.u32 %s29, 1
          %s223 = smul.addr %s222, 8
          %s224 = scalar_lea.vmem [#allocation2], %s223
          %226 = vsyncadd %s221, 0
          %s227 = smul.addr %s19, 8
          %s228 = scalar_lea.hbm %s0, %s227
          %s230 = sshll.u32 %s228, 4
          %s231 = int_to_ptr.hbm [resolvable:$true] %s230
          %s232 = sshll.u32 %s224, 4
          %s233 = int_to_ptr.vmem [resolvable:$true] %s232
          %235 = dma.hbm_to_vmem [thread:$0]  %s231, 128, %s233, %s221
        $region36: #{tpu_custom_call.1} parent=31 // pred_fallthru
          _
      $region32: #{tpu_custom_call.1} parent=5 // pred_fallthru
        _
      %p236 = scmp.le.s32.totalorder 1, %s19
      %p237 = scmp.lt.s32.totalorder %s19, 3
      %p238 = pnand %p236, %p237
      %p239 = pneg %p238
      // Predicated region
      $region37: #{tpu_custom_call.1} parent=5 // pred_check
        _
      $region38: #{tpu_custom_call.1} parent=5 // pred_check_branch
        %241 = sbr.rel (%p238) target = $region40
      $region39: #{tpu_custom_call.1} parent=5 // pred_region
        %s242 = ssub.s32 %s19, 1
        %s243 = sand.u32 %s32, 1
        %s244 = scalar_lea.sflag [#allocation3], %s243
        %s245 = sand.u32 %s32, 1
        %s246 = smul.addr %s245, 8
        %s247 = scalar_lea.vmem [#allocation2], %s246
        // Predicated region
        $region41: #{tpu_custom_call.1} parent=39 // pred_check
          %p248 = pneg %p45
        $region42: #{tpu_custom_call.1} parent=39 // pred_check_branch
          %250 = sbr.rel (%p248) target = $region44
        $region43: #{tpu_custom_call.1} parent=39 // pred_region
          %252 = dma.done %s244, 128
        $region44: #{tpu_custom_call.1} parent=39 // pred_fallthru
          _
        // Predicated region
        $region45: #{tpu_custom_call.1} parent=39 // pred_check
          %p253 = pneg %p66
        $region46: #{tpu_custom_call.1} parent=39 // pred_check_branch
          %255 = sbr.rel (%p253) target = $region48
        $region47: #{tpu_custom_call.1} parent=39 // pred_region
          %257 = dma.done [#allocation6], 512
        $region48: #{tpu_custom_call.1} parent=39 // pred_fallthru
          _
        // Predicated region
        $region49: #{tpu_custom_call.1} parent=39 // pred_check
          %p258 = pneg %p87
        $region50: #{tpu_custom_call.1} parent=39 // pred_check_branch
          %260 = sbr.rel (%p258) target = $region52
        $region51: #{tpu_custom_call.1} parent=39 // pred_region
          %262 = dma.done [#allocation6], 64
        $region52: #{tpu_custom_call.1} parent=39 // pred_fallthru
          _
        // Predicated region
        $region53: #{tpu_custom_call.1} parent=39 // pred_check
          %p263 = pneg %p108
        $region54: #{tpu_custom_call.1} parent=39 // pred_check_branch
          %265 = sbr.rel (%p263) target = $region56
        $region55: #{tpu_custom_call.1} parent=39 // pred_region
          %267 = dma.done [#allocation9], 1024
        $region56: #{tpu_custom_call.1} parent=39 // pred_fallthru
          _
        %s268 = sand.u32 %s32, 1
        %s269 = scalar_lea.sflag [#allocation3], %s268
        %s270 = sand.u32 %s32, 1
        %s271 = smul.addr %s270, 8
        %s272 = scalar_lea.vmem [#allocation2], %s271
        %p273 = pneg %p45
        %p274 = pneg %p42
        %p275 = pneg %p66
        %p276 = pneg %p63
        %p277 = pneg %p87
        %p278 = pneg %p84
        %p279 = pneg %p108
        %p280 = pneg %p105
        %p281 = pneg %p129
        %p282 = pneg %p126
        %p283 = pneg %p155
        %p284 = pneg %p152
        %s285 = sand.u32 %s142, 1
        %s286 = scalar_lea.sflag [#allocation4], %s285
        %s287 = sand.u32 %s142, 1
        %s288 = smul.addr %s287, 8
        %s289 = scalar_lea.vmem [#allocation10], %s288
        %v290 = vld [vmem:[%s247] sm:$0xff]
        %v291 = vld [vmem:[#allocation5] sm:$0xff]
        %v292 = vld [vmem:[#allocation5 + $0x8] sm:$0xff]
        %v293 = vld [vmem:[#allocation5 + $0x10] sm:$0xff]
        %v294 = vld [vmem:[#allocation5 + $0x18] sm:$0xff]
        %v295 = vld [vmem:[#allocation7] sm:$0x1]
        %v296 = vperm.slane %v295, 0
        %vm297 = vcmask 261120
        %v299 = vsel %vm297, %v290, 0
        %301 = vmatpush.msra.mxu0 0.0
        %302 = vmatpush.msra.mxu0 0.0
        %303 = vmatpush.msra.mxu0 0.0
        %304 = vmatpush.msra.mxu0 0.0
        %305 = vmatpush.msra.mxu0 0.0
        %306 = vmatpush.msra.mxu0 0.0
        %307 = vmatpush.msra.mxu0 0.0
        %308 = vmatpush.msra.mxu0 0.0
        %309 = vmatpush.msra.mxu0 0.0
        %310 = vmatpush.msra.mxu0 0.0
        %311 = vmatpush.msra.mxu0 0.0
        %312 = vmatpush.msra.mxu0 0.0
        %313 = vmatpush.msra.mxu0 %v294
        %314 = vmatpush.msra.mxu0 %v293
        %315 = vmatpush.msra.mxu0 %v292
        %316 = vmatpush.msra.mxu0 %v291
        %317 = vmatmul.f32.gmra.mxu0 %v299
        %v318 = vpop.f32.mrf.mxu0
        %v319 = vadd.f32 %v296, %v318
        %320 = vdwg.mxu0
        %v321 = vmul.f32 %v319, 0.5
        %v322 = vmul.f32 %v319, 0.70710677
        %v323 = vmul.f32 %v322, %v322
        %v324 = vmin.f32 16.0, %v323
        %v325 = vmul.f32 %v324, 2.1237322e-06
        %v326 = vadd.f32 %v325, 0.00028619796
        %v327 = vmul.f32 %v324, %v326
        %v328 = vadd.f32 %v327, 0.0036580483
        %v329 = vmul.f32 %v324, %v328
        %v330 = vadd.f32 %v329, 0.05243302
        %v331 = vmul.f32 %v324, %v330
        %v332 = vadd.f32 %v331, 0.18741608
        %v333 = vmul.f32 %v324, %v332
        %v334 = vadd.f32 %v333, 1.1283791
        %v335 = vmul.f32 %v322, %v334
        %v336 = vmul.f32 %v324, 3.8918573e-05
        %v337 = vadd.f32 %v336, 0.001143296
        %v338 = vmul.f32 %v324, %v337
        %v339 = vadd.f32 %v338, 0.014752088
        %v340 = vmul.f32 %v324, %v339
        %v341 = vadd.f32 %v340, 0.112945676
        %v342 = vmul.f32 %v324, %v341
        %v343 = vadd.f32 %v342, 0.4994258
        %v344 = vmul.f32 %v324, %v343
        %v345 = vadd.f32 %v344, 1.0
        %v346 = vrcp.pop %v345
        %v347 = vmul.f32 %v345, %v346
        %v348 = vsub.f32 1.0, %v347
        %v349 = vmul.f32 %v346, %v348
        %v350 = vadd.f32 %v346, %v349
        %vm351 = vweird.f32 %v345
        %vm352 = vweird.f32 %v346
        %vm353 = vmor %vm351, %vm352
        %v354 = vsel %vm353, %v346, %v350
        %v355 = vand.u32 2147483647, %v345
        %vm356 = vcmp.eq.f32.partialorder %v355, 8.507059e+37
        %v357 = vand.u32 %v345, 2147483648
        %v358 = vor.u32 1.1754944e-38, %v357
        %v359 = vsel %vm356, %v358, %v354
        %v360 = vmul.f32 %v335, %v359
        %v361 = vmin.f32 %v360, 1.0
        %v362 = vmax.f32 %v361, -1.0
        %v363 = vadd.f32 %v362, 1.0
        %v364 = vmul.f32 %v321, %v363
        %vm365 = vcmask 523264
        %v366 = vsel %vm365, %v364, 0.0
        %367 = vadd.xlane.f32.xlu0 %v366
        %v368 = vpop.xlane.xlu0 %367
        %v369 = vrcp.pop 64.0
        %v370 = vmul.f32 64.0, %v369
        %v371 = vsub.f32 1.0, %v370
        %v372 = vmul.f32 %v369, %v371
        %v373 = vadd.f32 %v369, %v372
        %vm374 = vweird.f32 %v369
        %v375 = vsel %vm374, %v369, %v373
        %v376 = vmul.f32 %v368, %v375
        %v377 = vsub.f32 %v364, %v376
        %v378 = vmul.f32 %v377, %v377
        %v379 = vsel %vm365, %v378, 0.0
        %380 = vadd.xlane.f32.xlu0 %v379
        %v381 = vpop.xlane.xlu0 %380
        %v382 = vmul.f32 %v381, %v375
        %v383 = vadd.f32 %v382, 1e-12
        %v384 = vrsqrt.pop %v383
        %v385 = vmul.f32 %v384, %v383
        %v386 = vmul.f32 %v385, %v384
        %v387 = vmul.f32 0.5, %v386
        %v388 = vsub.f32 1.5, %v387
        %v389 = vmul.f32 %v384, %v388
        %vm390 = vweird.f32 %v383
        %vm391 = vweird.f32 %v384
        %vm392 = vmor %vm390, %vm391
        %v393 = vsel %vm392, %v384, %v389
        %v394 = vmul.f32 %v377, %v393
        %v395 = vld [vmem:[#allocation7 + $0x1] sm:$0x1]
        %v396 = vperm.slane %v395, 0
        %v397 = vmul.f32 %v394, %v396
        %v398 = vld [vmem:[#allocation7 + $0x2] sm:$0x1]
        %v399 = vperm.slane %v398, 0
        %v400 = vadd.f32 %v397, %v399
        %v401 = vld [vmem:[#allocation8] sm:$0xff]
        %v402 = vld [vmem:[#allocation8 + $0x8] sm:$0xff]
        %v403 = vld [vmem:[#allocation8 + $0x10] sm:$0xff]
        %v404 = vld [vmem:[#allocation8 + $0x18] sm:$0xff]
        %v405 = vld [vmem:[#allocation8 + $0x20] sm:$0xff]
        %v406 = vld [vmem:[#allocation8 + $0x28] sm:$0xff]
        %v407 = vld [vmem:[#allocation8 + $0x30] sm:$0xff]
        %v408 = vld [vmem:[#allocation8 + $0x38] sm:$0xff]
        %v409 = vld [vmem:[%s4] sm:$0x1]
        %v411 = vperm.slane %v409, 0
        %v414 = vsel %vm365, %v400, 0
        %416 = vmatpush.msra.mxu0 0.0
        %417 = vmatpush.msra.mxu0 0.0
        %418 = vmatpush.msra.mxu0 0.0
        %419 = vmatpush.msra.mxu0 0.0
        %420 = vmatpush.msra.mxu0 0.0
        %421 = vmatpush.msra.mxu0 0.0
        %422 = vmatpush.msra.mxu0 0.0
        %423 = vmatpush.msra.mxu0 0.0
        %424 = vmatpush.msra.mxu0 %v408
        %425 = vmatpush.msra.mxu0 %v407
        %426 = vmatpush.msra.mxu0 %v406
        %427 = vmatpush.msra.mxu0 %v405
        %428 = vmatpush.msra.mxu0 %v404
        %429 = vmatpush.msra.mxu0 %v403
        %430 = vmatpush.msra.mxu0 %v402
        %431 = vmatpush.msra.mxu0 %v401
        %432 = vmatmul.f32.gmra.mxu0 %v414
        %v433 = vpop.f32.mrf.mxu0
        %v434 = vadd.f32 %v411, %v433
        %435 = vdwg.mxu0
        %436 = vst [vmem:[%s289] sm:$0xff] %v434
        %s437 = sand.u32 %s142, 1
        %s438 = scalar_lea.sflag [#allocation4], %s437
        %s439 = sand.u32 %s142, 1
        %s440 = smul.addr %s439, 8
        %s441 = scalar_lea.vmem [#allocation10], %s440
        // Predicated region
        $region57: #{tpu_custom_call.1} parent=39 // pred_check
          %p442 = pneg %p152
        $region58: #{tpu_custom_call.1} parent=39 // pred_check_branch
          %444 = sbr.rel (%p442) target = $region60
        $region59: #{tpu_custom_call.1} parent=39 // pred_region
          %446 = vsyncadd %s438, 0
          %s447 = smul.addr %s24, 8
          %s448 = scalar_lea.hbm %s5, %s447
          %s450 = sshll.u32 %s441, 4
          %s451 = int_to_ptr.vmem [resolvable:$true] %s450
          %s452 = sshll.u32 %s448, 4
          %s453 = int_to_ptr.hbm [resolvable:$true] %s452
          %455 = dma.vmem_to_hbm [thread:$0]  %s451, 128, %s453, %s438
        $region60: #{tpu_custom_call.1} parent=39 // pred_fallthru
          _
      $region40: #{tpu_custom_call.1} parent=5 // pred_fallthru
        _
      %p456 = scmp.le.s32.totalorder 2, %s19
      // Predicated region
      $region61: #{tpu_custom_call.1} parent=5 // pred_check
        %p457 = pneg %p456
      $region62: #{tpu_custom_call.1} parent=5 // pred_check_branch
        %459 = sbr.rel (%p457) target = $region64
      $region63: #{tpu_custom_call.1} parent=5 // pred_region
        %s460 = ssub.s32 %s19, 2
        // Predicated region
        $region65: #{tpu_custom_call.1} parent=63 // pred_check
          %p461 = pneg %p158
        $region66: #{tpu_custom_call.1} parent=63 // pred_check_branch
          %463 = sbr.rel (%p461) target = $region68
        $region67: #{tpu_custom_call.1} parent=63 // pred_region
          %s464 = sand.u32 %s143, 1
          %s465 = scalar_lea.sflag [#allocation4], %s464
          %s466 = sand.u32 %s143, 1
          %s467 = smul.addr %s466, 8
          %s468 = scalar_lea.vmem [#allocation10], %s467
          %470 = dma.done %s465, 128
        $region68: #{tpu_custom_call.1} parent=63 // pred_fallthru
          _
      $region64: #{tpu_custom_call.1} parent=5 // pred_fallthru
        _
    $region6: #{tpu_custom_call.1} parent=1 // loop_footer
      %s23 = sadd.s32 1, %s19
    $region7: #{tpu_custom_call.1} parent=1 // loop_footer_branch
      %18 = sbr.rel target = $region3
    $region8: #{tpu_custom_call.1} parent=1 // loop_exit
      _
    %471 = vsyncpa [#allocation3], 1
    %s472 = scalar_lea.sflag [#allocation3], 1
    %473 = vsyncpa %s472, 1
    %474 = vsyncpa [#allocation6], 1
    %475 = vsyncpa [#allocation9], 1
    %476 = vsyncpa [#allocation4], 1
    %s477 = scalar_lea.sflag [#allocation4], 1
    %478 = vsyncpa %s477, 1

</llo_original>
